<compile_context>
chip_gen: v7x
topology: tpu7x:2x2x1
jax: 0.10.0
libtpu: 0.0.40
codegen_flags: <defaults>
</compile_context>

<pallas_src>
import functools

import jax
import jax.numpy as jnp
from jax import lax
from jax.experimental import pallas as pl
from jax.experimental.pallas import tpu as pltpu


def _choose_m_tile(m, n_batch, target=512):
    """Largest spatial (lane) tile that divides M, is a multiple of 128
    (lane-dense, unmasked stores), is <= target, and keeps >= 2 total grid
    steps when possible so both v7x TensorCores are used even at batch 1."""
    cands = [t for t in range(128, m + 1, 128) if m % t == 0]
    if not cands:
        return m                       # full-dim block (exempt from 128 rule)

    def pick(cs):
        small = [t for t in cs if t <= target]
        return max(small) if small else min(cs)

    tm = pick(cands)
    if n_batch * (m // tm) < 2:        # v7x: avoid a 1-step grid if we can
        multi = [t for t in cands if m // t >= 2]
        if multi:
            tm = pick(multi)
    return tm


def _matmul_bn_lrelu_kernel(p_ref, w_ref, b_ref, o_ref, *, neg_slope):
    # p_ref: (1, K, tm)      bf16 im2col patches, channel-major K, lanes = spatial
    # w_ref: (Cout_p, K)     bf16 conv weight with BN scale folded in (resident)
    # b_ref: (Cout_p, 1)     f32 folded BN bias (resident)
    # o_ref: (1, Cout_p, tm) channel-major output tile (maps straight to NCHW)
    acc = jnp.dot(w_ref[...], p_ref[0],
                  preferred_element_type=jnp.float32)       # (Cout_p, tm) f32
    y = acc + b_ref[...]                                    # bias, lane broadcast
    y = jnp.maximum(y, neg_slope * y)                       # LeakyReLU, one VALU op
    o_ref[0] = y.astype(o_ref.dtype)


def conv_block(x_nchw, weight_oihw, gamma, beta, running_mean, running_var,
               *, stride=1, eps=1e-5, neg_slope=0.1):
    """Conv2d(bias=False, padding=k//2) + BatchNorm2d(eval) + LeakyReLU(0.1).

    x_nchw:      (N, Cin, H, W)        -- PyTorch layout
    weight_oihw: (Cout, Cin, KH, KW)   -- PyTorch layout
    returns:     (N, Cout, H_out, W_out) in NCHW.
    """
    n, c_in, h, w = x_nchw.shape
    c_out, _, kh_size, kw_size = weight_oihw.shape
    pad_h, pad_w = kh_size // 2, kw_size // 2

    h_out = (h + 2 * pad_h - kh_size) // stride + 1
    w_out = (w + 2 * pad_w - kw_size) // stride + 1
    m = h_out * w_out
    k_dim = c_in * kh_size * kw_size
    cout_p = ((c_out + 7) // 8) * 8     # sublane pad only (channel-major output)

    # ---- wrapper-side im2col (small-Cin path): cast once to bf16, one pad,
    # KH*KW (possibly strided) slices; kernel sees a stride-1 problem.
    xb = x_nchw.astype(jnp.bfloat16)
    xp = jnp.pad(xb, ((0, 0), (0, 0), (pad_h, pad_h), (pad_w, pad_w)))
    taps = []
    for kh in range(kh_size):
        for kw in range(kw_size):
            taps.append(lax.slice(
                xp, (0, 0, kh, kw),
                (n, c_in,
                 kh + (h_out - 1) * stride + 1,
                 kw + (w_out - 1) * stride + 1),
                (1, 1, stride, stride)))
    patches = jnp.stack(taps, axis=2)                    # (N, Cin, KH*KW, Ho, Wo)
    patches = patches.reshape(n, k_dim, m)               # K index = c*KH*KW + tap

    # ---- fold BatchNorm (eval, running stats) into the conv weight / bias.
    inv_std = 1.0 / jnp.sqrt(running_var.astype(jnp.float32) + eps)
    scale = gamma.astype(jnp.float32) * inv_std                      # (Cout,)
    bias = beta.astype(jnp.float32) - running_mean.astype(jnp.float32) * scale

    w2d = (weight_oihw.astype(jnp.float32)
           * scale[:, None, None, None]).reshape(c_out, k_dim)       # OIHW reshape
    w2d = jnp.pad(w2d, ((0, cout_p - c_out), (0, 0))).astype(jnp.bfloat16)
    b2d = jnp.pad(bias, (0, cout_p - c_out)).reshape(cout_p, 1)      # f32

    tm = _choose_m_tile(m, n)
    m_tiles = m // tm

    # Per-step VMEM: double-buffered patches + output tiles, resident weight/bias.
    step_bytes = (2 * (k_dim * tm * 2 + cout_p * tm * 4)
                  + cout_p * k_dim * 2 + cout_p * 4)
    vmem_limit = int(min(max(3 * step_bytes, 32 * 1024 * 1024), 48 * 1024 * 1024))

    kernel = functools.partial(_matmul_bn_lrelu_kernel, neg_slope=neg_slope)

    out = pl.pallas_call(
        kernel,
        out_shape=jax.ShapeDtypeStruct((n, cout_p, m), x_nchw.dtype),
        grid_spec=pltpu.PrefetchScalarGridSpec(
            num_scalar_prefetch=0,
            grid=(n, m_tiles),
            in_specs=[
                pl.BlockSpec((1, k_dim, tm), lambda b, t: (b, 0, t)),   # patches
                pl.BlockSpec((cout_p, k_dim), lambda b, t: (0, 0)),     # weight
                pl.BlockSpec((cout_p, 1), lambda b, t: (0, 0)),         # bias
            ],
            out_specs=pl.BlockSpec((1, cout_p, tm), lambda b, t: (b, 0, t)),
        ),
        compiler_params=pltpu.CompilerParams(
            dimension_semantics=("parallel", "parallel"),
            vmem_limit_bytes=vmem_limit),
    )(patches, w2d, b2d)

    # Channel-major output is already NCHW: slice off the sublane pad, reshape.
    out = out[:, :c_out, :].reshape(n, c_out, h_out, w_out)
    return out


def _reference(x_nchw, weight_oihw, gamma, beta, running_mean, running_var,
               *, stride=1, eps=1e-5, neg_slope=0.1):
    pad = weight_oihw.shape[2] // 2
    y = jax.lax.conv_general_dilated(
        x_nchw.astype(jnp.float32), weight_oihw.astype(jnp.float32),
        window_strides=(stride, stride), padding=((pad, pad), (pad, pad)),
        dimension_numbers=("NCHW", "OIHW", "NCHW"))
    inv_std = 1.0 / jnp.sqrt(running_var + eps)
    y = (y - running_mean[None, :, None, None]) * inv_std[None, :, None, None]
    y = y * gamma[None, :, None, None] + beta[None, :, None, None]
    return jnp.where(y > 0, y, neg_slope * y)


if __name__ == "__main__":
    key = jax.random.PRNGKey(0)
    k_x, k_w, k_g, k_b, k_m, k_v = jax.random.split(key, 6)

    # small shapes consistent with the module: Conv(in=4, out=8, k=3, stride=1)
    N, C_IN, H, W = 2, 4, 16, 16
    C_OUT, K = 8, 3

    x = jax.random.normal(k_x, (N, C_IN, H, W), jnp.float32)
    weight = jax.random.normal(k_w, (C_OUT, C_IN, K, K), jnp.float32) * 0.1
    gamma = 1.0 + 0.1 * jax.random.normal(k_g, (C_OUT,), jnp.float32)
    beta = 0.1 * jax.random.normal(k_b, (C_OUT,), jnp.float32)
    running_mean = 0.1 * jax.random.normal(k_m, (C_OUT,), jnp.float32)
    running_var = jnp.abs(1.0 + 0.1 * jax.random.normal(k_v, (C_OUT,), jnp.float32))

    out = conv_block(x, weight, gamma, beta, running_mean, running_var, stride=1)
    out = jax.block_until_ready(out)

    ref = _reference(x, weight, gamma, beta, running_mean, running_var, stride=1)
    assert out.shape == (N, C_OUT, H, W), out.shape
    # bf16 MXU operands with f32 accumulation -> loosen tolerance vs f32 ref.
    assert jnp.allclose(out, ref, atol=3e-2, rtol=3e-2), \
        float(jnp.max(jnp.abs(out - ref)))

    print("KERNEL_OK")
</pallas_src>

<mosaic_0001>
module attributes {stable_mosaic.version = 11 : i64} {
  func.func @_matmul_bn_lrelu_kernel(%arg0: i32, %arg1: i32, %arg2: memref<1x36x256xbf16, #tpu.memory_space<vmem>>, %arg3: memref<8x36xbf16, #tpu.memory_space<vmem>>, %arg4: memref<8x1xf32, #tpu.memory_space<vmem>>, %arg5: memref<1x8x256xf32, #tpu.memory_space<vmem>>) attributes {dimension_semantics = [#tpu.dimension_semantics<parallel>, #tpu.dimension_semantics<parallel>], iteration_bounds = array<i64: 2, 1>, scalar_prefetch = 0 : i64, scratch_operands = 0 : i64, tpu.core_type = #tpu.core_type<tc>, window_params = [{transform_indices = @transform_0, window_bounds = array<i64: 1, 36, 256>}, {pipeline_mode = #tpu.pipeline_mode<synchronous>, transform_indices = @transform_1, window_bounds = array<i64: 8, 36>}, {pipeline_mode = #tpu.pipeline_mode<synchronous>, transform_indices = @transform_2, window_bounds = array<i64: 8, 1>}, {transform_indices = @transform_3, window_bounds = array<i64: 1, 8, 256>}]} {
    %c0 = arith.constant 0 : index
    %c0_0 = arith.constant 0 : index
    %0 = vector.load %arg3[%c0, %c0_0] : memref<8x36xbf16, #tpu.memory_space<vmem>>, vector<8x36xbf16>
    %c0_1 = arith.constant 0 : index
    %c0_2 = arith.constant 0 : index
    %c0_3 = arith.constant 0 : index
    %1 = vector.load %arg2[%c0_1, %c0_2, %c0_3] : memref<1x36x256xbf16, #tpu.memory_space<vmem>>, vector<1x36x256xbf16>
    %2 = vector.shape_cast %1 : vector<1x36x256xbf16> to vector<36x256xbf16>
    %cst = arith.constant dense<0.000000e+00> : vector<8x256xf32>
    %3 = tpu.matmul %0, %2, %cst {dimension_numbers = #tpu.dot_dimension_numbers<[1], [0], [0], [1], [0, 0, 1, 1], [], []>} : vector<8x36xbf16>, vector<36x256xbf16>, vector<8x256xf32> -> vector<8x256xf32>
    %c0_4 = arith.constant 0 : index
    %c0_5 = arith.constant 0 : index
    %4 = vector.load %arg4[%c0_4, %c0_5] : memref<8x1xf32, #tpu.memory_space<vmem>>, vector<8x1xf32>
    %5 = vector.broadcast %4 : vector<8x1xf32> to vector<8x256xf32>
    %6 = arith.addf %3, %5 : vector<8x256xf32>
    %cst_6 = arith.constant 1.000000e-01 : f32
    %7 = vector.broadcast %cst_6 : f32 to vector<8x256xf32>
    %8 = arith.mulf %7, %6 : vector<8x256xf32>
    %9 = arith.maximumf %6, %8 : vector<8x256xf32>
    %c0_7 = arith.constant 0 : index
    %c0_8 = arith.constant 0 : index
    %c0_9 = arith.constant 0 : index
    %10 = vector.load %arg5[%c0_7, %c0_8, %c0_9] : memref<1x8x256xf32, #tpu.memory_space<vmem>>, vector<1x8x256xf32>
    %11 = vector.shape_cast %10 : vector<1x8x256xf32> to vector<8x256xf32>
    %12 = vector.shape_cast %9 : vector<8x256xf32> to vector<1x8x256xf32>
    tpu.vector_store %arg5[%c0_7, %c0_8, %c0_9], %12 {strides = array<i32>} : memref<1x8x256xf32, #tpu.memory_space<vmem>>, vector<1x8x256xf32>,
    return
  }
  func.func @transform_0(%arg0: i32, %arg1: i32) -> (i32, i32, i32) {
    %c0_i32 = arith.constant 0 : i32
    %c0_i32_0 = arith.constant 0 : i32
    return %arg0, %c0_i32, %arg1 : i32, i32, i32
  }
  func.func @transform_1(%arg0: i32, %arg1: i32) -> (i32, i32) {
    %c0_i32 = arith.constant 0 : i32
    %c0_i32_0 = arith.constant 0 : i32
    %c0_i32_1 = arith.constant 0 : i32
    return %c0_i32, %c0_i32_0 : i32, i32
  }
  func.func @transform_2(%arg0: i32, %arg1: i32) -> (i32, i32) {
    %c0_i32 = arith.constant 0 : i32
    %c0_i32_0 = arith.constant 0 : i32
    %c0_i32_1 = arith.constant 0 : i32
    return %c0_i32, %c0_i32_0 : i32, i32
  }
  func.func @transform_3(%arg0: i32, %arg1: i32) -> (i32, i32, i32) {
    %c0_i32 = arith.constant 0 : i32
    %c0_i32_0 = arith.constant 0 : i32
    return %arg0, %c0_i32, %arg1 : i32, i32, i32
  }
}

</mosaic_0001>

<llo_original>
// kernel: tpu_custom_call.1
$region0: #{tpu_custom_call.1}
  #allocation0 [shape = 'u32[]', space=smem, size = 0x4, offset = 0x4, fixed_abs, tag = 'smem constant byte address 0x4 - core index']
  #allocation1 [shape = 'u32[144,128]{1,0:T(1,128)}', space=vmem, size = 0x12000, scoped, tag = 'internal scratch']
  %s0 = inlined_call_operand.vmem [shape: bf16[2,36,256], index: 0, kind: input, shape index: {}]
  %s1 = inlined_call_operand.vmem [shape: bf16[8,36], index: 1, kind: input, shape index: {}]
  %s2 = inlined_call_operand.vmem [shape: f32[8,1], index: 2, kind: input, shape index: {}]
  %s3 = inlined_call_operand.hbm [shape: f32[2,8,256], index: 3, kind: output, shape index: {}]
  %s4 = sld [smem:[#allocation0]]
  $region45: #{tpu_custom_call.1} parent=0
    _
  %s6 = ssub.s32 1, %s4
  %s7 = scalar_select 0, %s6, %s4
  $region1: #{tpu_custom_call.1} parent=0
    #allocation2 [shape = 'u8[16384]{0}', space=vmem, size = 0x4000, scoped, tag = 'output window, operand 0']
    #allocation3 [shape = 's32[2]{0}', space=sflag, size = 0x8, scoped, tag = 'scoped memory for tpu_custom_call.1']
    %8 = vsyncpa [#allocation3], 0
    %s9 = scalar_lea.sflag [#allocation3], 1
    %10 = vsyncpa %s9, 0
    loop: start=0, step=1, limit=4
    $region2: #{tpu_custom_call.1} parent=1 // loop_pre_header
      _
    $region3: #{tpu_custom_call.1} parent=1 // loop_header
      %s12 = sphi 0, %s16
      %p13 = scmp.ge.s32.totalorder %s12, 4
      %s19 = sphi 0, %s31
      %s20 = sphi 0, %s27
      %s21 = sphi 0, %s19
      %s22 = sphi 0, %s20
      %s23 = sphi 0, %s21
      %s24 = sphi 0, %s22
      %s36 = sphi 0, %s38
      %s39 = sphi 0, %s36
      %s40 = sphi 0, %s39
      %s56 = sphi 0, %s40
      %s60 = sphi 0, %s60
      %s62 = sphi 0, %s60
      %s63 = sphi 0, %s62
      %s77 = sphi 0, %s63
      %s81 = sphi 0, %s81
      %s83 = sphi 0, %s81
      %s84 = sphi 0, %s83
      %s98 = sphi 0, %s84
      %s106 = sphi 0, %s108
      %s109 = sphi 0, %s106
      %s110 = sphi 0, %s109
      %s126 = sphi 0, %s110
    $region4: #{tpu_custom_call.1} parent=1 // loop_header_branch
      %15 = sbr.rel (%p13) target = $region8
    $region5: #{tpu_custom_call.1} parent=1 // loop_body
      %s17 = ssub.s32 %s12, 1
      %s18 = ssub.s32 %s12, 2
      %s25 = sadd.s32 1, %s20
      %p26 = scmp.ge.s32.totalorder %s25, 1
      %s27 = scalar_select %p26, 0, %s25
      %s28 = sadd.s32 1, %s19
      %s29 = scalar_select %p26, %s28, %s19
      %p30 = scmp.ge.s32.totalorder %s29, 2
      %s31 = scalar_select %p30, 0, %s29
      %s32 = ssub.s32 %s19, %s31
      %s33 = ssub.s32 %s20, %s27
      %s34 = sor.u32 %s32, %s33
      %p35 = scmp.eq.s32.totalorder %s34, 0
      %s37 = sadd.s32 %s36, 1
      %s38 = scalar_select %p35, %s36, %s37
      %p41 = pneg %p35
      %p42 = scmp.eq.s32.totalorder %s12, 1
      %p43 = por %p41, %p42
      %p44 = scmp.ne.s32.totalorder %s36, %s39
      %p45 = scmp.eq.s32.totalorder %s12, 0
      %p46 = por %p44, %p45
      %p47 = scmp.ne.s32.totalorder %s36, %s39
      %p48 = scmp.eq.s32.totalorder %s17, 1
      %p49 = por %p47, %p48
      %p50 = scmp.ne.s32.totalorder %s39, %s40
      %p51 = scmp.eq.s32.totalorder %s17, 0
      %p52 = por %p50, %p51
      %p53 = scmp.ne.s32.totalorder %s39, %s40
      %p54 = scmp.eq.s32.totalorder %s18, 1
      %p55 = por %p53, %p54
      %p57 = scmp.ne.s32.totalorder %s40, %s56
      %p58 = scmp.eq.s32.totalorder %s18, 0
      %p59 = por %p57, %p58
      %s61 = sadd.s32 %s60, 1
      %p64 = scmp.eq.s32.totalorder %s12, 1
      %p65 = scmp.ne.s32.totalorder %s60, %s62
      %p66 = scmp.eq.s32.totalorder %s12, 0
      %p67 = por %p65, %p66
      %p68 = scmp.ne.s32.totalorder %s60, %s62
      %p69 = scmp.eq.s32.totalorder %s17, 1
      %p70 = por %p68, %p69
      %p71 = scmp.ne.s32.totalorder %s62, %s63
      %p72 = scmp.eq.s32.totalorder %s17, 0
      %p73 = por %p71, %p72
      %p74 = scmp.ne.s32.totalorder %s62, %s63
      %p75 = scmp.eq.s32.totalorder %s18, 1
      %p76 = por %p74, %p75
      %p78 = scmp.ne.s32.totalorder %s63, %s77
      %p79 = scmp.eq.s32.totalorder %s18, 0
      %p80 = por %p78, %p79
      %s82 = sadd.s32 %s81, 1
      %p85 = scmp.eq.s32.totalorder %s12, 1
      %p86 = scmp.ne.s32.totalorder %s81, %s83
      %p87 = scmp.eq.s32.totalorder %s12, 0
      %p88 = por %p86, %p87
      %p89 = scmp.ne.s32.totalorder %s81, %s83
      %p90 = scmp.eq.s32.totalorder %s17, 1
      %p91 = por %p89, %p90
      %p92 = scmp.ne.s32.totalorder %s83, %s84
      %p93 = scmp.eq.s32.totalorder %s17, 0
      %p94 = por %p92, %p93
      %p95 = scmp.ne.s32.totalorder %s83, %s84
      %p96 = scmp.eq.s32.totalorder %s18, 1
      %p97 = por %p95, %p96
      %p99 = scmp.ne.s32.totalorder %s84, %s98
      %p100 = scmp.eq.s32.totalorder %s18, 0
      %p101 = por %p99, %p100
      %s102 = ssub.s32 %s19, %s31
      %s103 = ssub.s32 %s20, %s27
      %s104 = sor.u32 %s102, %s103
      %p105 = scmp.eq.s32.totalorder %s104, 0
      %s107 = sadd.s32 %s106, 1
      %s108 = scalar_select %p105, %s106, %s107
      %p111 = pneg %p105
      %p112 = scmp.eq.s32.totalorder %s12, 1
      %p113 = por %p111, %p112
      %p114 = scmp.ne.s32.totalorder %s106, %s109
      %p115 = scmp.eq.s32.totalorder %s12, 0
      %p116 = por %p114, %p115
      %p117 = scmp.ne.s32.totalorder %s106, %s109
      %p118 = scmp.eq.s32.totalorder %s17, 1
      %p119 = por %p117, %p118
      %p120 = scmp.ne.s32.totalorder %s109, %s110
      %p121 = scmp.eq.s32.totalorder %s17, 0
      %p122 = por %p120, %p121
      %p123 = scmp.ne.s32.totalorder %s109, %s110
      %p124 = scmp.eq.s32.totalorder %s18, 1
      %p125 = por %p123, %p124
      %p127 = scmp.ne.s32.totalorder %s110, %s126
      %p128 = scmp.eq.s32.totalorder %s18, 0
      %p129 = por %p127, %p128
      %p130 = scmp.le.s32.totalorder 1, %s12
      %p131 = scmp.lt.s32.totalorder %s12, 3
      %p132 = pnand %p130, %p131
      %p133 = pneg %p132
      // Predicated region
      $region9: #{tpu_custom_call.1} parent=5 // pred_check
        _
      $region10: #{tpu_custom_call.1} parent=5 // pred_check_branch
        %135 = sbr.rel (%p132) target = $region12
      $region11: #{tpu_custom_call.1} parent=5 // pred_region
        %s136 = ssub.s32 %s12, 1
        // Predicated region
        $region13: #{tpu_custom_call.1} parent=11 // pred_check
          %p137 = pneg %p73
        $region14: #{tpu_custom_call.1} parent=11 // pred_check_branch
          %139 = sbr.rel (%p137) target = $region16
        $region15: #{tpu_custom_call.1} parent=11 // pred_region
          _
        $region16: #{tpu_custom_call.1} parent=11 // pred_fallthru
          _
        // Predicated region
        $region17: #{tpu_custom_call.1} parent=11 // pred_check
          %p140 = pneg %p94
        $region18: #{tpu_custom_call.1} parent=11 // pred_check_branch
          %142 = sbr.rel (%p140) target = $region20
        $region19: #{tpu_custom_call.1} parent=11 // pred_region
          _
        $region20: #{tpu_custom_call.1} parent=11 // pred_fallthru
          _
      $region12: #{tpu_custom_call.1} parent=5 // pred_fallthru
        _
      %p143 = scmp.lt.s32.totalorder %s12, 2
      // Predicated region
      $region21: #{tpu_custom_call.1} parent=5 // pred_check
        %p144 = pneg %p143
      $region22: #{tpu_custom_call.1} parent=5 // pred_check_branch
        %146 = sbr.rel (%p144) target = $region24
      $region23: #{tpu_custom_call.1} parent=5 // pred_region
        // Predicated region
        $region25: #{tpu_custom_call.1} parent=23 // pred_check
          %p147 = pneg %p46
        $region26: #{tpu_custom_call.1} parent=23 // pred_check_branch
          %149 = sbr.rel (%p147) target = $region28
        $region27: #{tpu_custom_call.1} parent=23 // pred_region
          %s150 = smul.u32 2, %s20
          %p151 = scmp.lt.s32.totalorder %s19, 1
          %s152 = scalar_select %p151, %s19, 1
          %p153 = scmp.lt.s32.totalorder %s150, 1
          %s154 = scalar_select %p153, %s150, 1
          %s155 = smul.addr %s152, 10
          %s156 = sadd.s32 %s154, %s155
          %s157 = smul.addr %s156, 4
          %s158 = scalar_lea.vmem %s0, %s157
          %s159 = smul.u32 2, %s20
        $region28: #{tpu_custom_call.1} parent=23 // pred_fallthru
          _
      $region24: #{tpu_custom_call.1} parent=5 // pred_fallthru
        _
      %p160 = scmp.le.s32.totalorder 1, %s12
      %p161 = scmp.lt.s32.totalorder %s12, 3
      %p162 = pnand %p160, %p161
      %p163 = pneg %p162
      // Predicated region
      $region29: #{tpu_custom_call.1} parent=5 // pred_check
        _
      $region30: #{tpu_custom_call.1} parent=5 // pred_check_branch
        %165 = sbr.rel (%p162) target = $region32
      $region31: #{tpu_custom_call.1} parent=5 // pred_region
        %s166 = ssub.s32 %s12, 1
        %s167 = smul.u32 2, %s22
        %p168 = scmp.lt.s32.totalorder %s21, 1
        %s169 = scalar_select %p168, %s21, 1
        %p170 = scmp.lt.s32.totalorder %s167, 1
        %s171 = scalar_select %p170, %s167, 1
        %s172 = smul.addr %s169, 10
        %s173 = sadd.s32 %s171, %s172
        %s174 = smul.addr %s173, 4
        %s175 = scalar_lea.vmem %s0, %s174
        %p176 = pneg %p52
        %p177 = pneg %p49
        %p178 = pneg %p73
        %p179 = pneg %p70
        %p180 = pneg %p94
        %p181 = pneg %p91
        %p182 = pneg %p122
        %p183 = pneg %p119
        %s184 = sand.u32 %s109, 1
        %s185 = scalar_lea.sflag [#allocation3], %s184
        %s186 = sand.u32 %s109, 1
        %s187 = smul.addr %s186, 16
        %s188 = scalar_lea.vmem [#allocation2], %s187
        %s189 = smul.u32 2, %s22
        %p190 = scmp.lt.s32.totalorder %s21, 1
        %s191 = scalar_select %p190, %s21, 1
        %p192 = scmp.lt.s32.totalorder %s189, 1
        %s193 = scalar_select %p192, %s189, 1
        %s194 = smul.addr %s191, 10
        %s195 = sadd.s32 %s193, %s194
        %s196 = smul.addr %s195, 4
        %s197 = scalar_lea.vmem %s0, %s196
        %s198 = smul.u32 2, %s22
        %s199 = smul.u32 2, %s22
        %v201 = vld [vmem:[%s1] sm:$0xf]
        %v202 = vld [vmem:[%s197] sm:$0xff]
        %v203 = vld [vmem:[%s197 + $0x8] sm:$0xff]
        %v204 = vld [vmem:[%s197 + $0x10] sm:$0xff]
        %v205 = vld [vmem:[%s197 + $0x18] sm:$0xff]
        %v206 = vld [vmem:[%s197 + $0x20] sm:$0x33]
        %v207 = vld [vmem:[%s2] sm:$0xff]
        %209 = vset.pattern.permute.xlu0 0
        %210 = vperm.xlu0 %209, %v207
        %v211 = vpop.permute.xlu0 %210
        %v218 = vunpack.c.l.b16 %v202
        %v219 = vunpack.c.h.b16 %v202
        %v220 = vunpack.c.l.b16 %v203
        %v221 = vunpack.c.h.b16 %v203
        %v222 = vunpack.c.l.b16 %v204
        %v223 = vunpack.c.h.b16 %v204
        %v224 = vunpack.c.l.b16 %v205
        %v225 = vunpack.c.h.b16 %v205
        %v226 = vunpack.c.l.b16 %v206
        %v227 = vunpack.c.h.b16 %v206
        %v228 = vpack.c.b16 %v220, %v218
        %v229 = vpack.c.b16 %v221, %v219
        %v230 = vpack.c.b16 %v224, %v222
        %v231 = vpack.c.b16 %v225, %v223
        %v232 = vpack.c.b16 %v226, %v226
        %v233 = vpack.c.b16 %v227, %v227
        %vm238 = vcmask 293888
        %v240 = vsel %vm238, %v201, 0
        %vm242 = vcmask 1041408
        %v244 = vsel %vm242, %v232, 0
        %v247 = vsel %vm242, %v233, 0
        %249 = vmatprep.subr.bf16.mxu0 %v229
        %250 = vmatpush1.bf16.msra.mxu0 %v228
        %251 = vmatprep.subr.bf16.mxu0 %v231
        %252 = vmatpush1.bf16.msra.mxu0 %v230
        %253 = vmatprep.subr.bf16.mxu0 %v247
        %254 = vmatpush1.bf16.msra.mxu0 %v244
        %255 = vmatprep.subr.bf16.mxu0 0
        %256 = vmatpush1.bf16.msra.mxu0 0
        %257 = vmatprep.subr.bf16.mxu0 0
        %258 = vmatpush1.bf16.msra.mxu0 0
        %259 = vmatprep.subr.bf16.mxu0 0
        %260 = vmatpush1.bf16.msra.mxu0 0
        %261 = vmatprep.subr.bf16.mxu0 0
        %262 = vmatpush1.bf16.msra.mxu0 0
        %263 = vmatprep.subr.bf16.mxu0 0
        %264 = vmatpush1.bf16.msra.mxu0 0
        %265 = vmatprep.subr.bf16.mxu0 0
        %266 = vmatpush1.bf16.msra.mxu0 0
        %267 = vmatprep.subr.bf16.mxu0 0
        %268 = vmatpush1.bf16.msra.mxu0 0
        %269 = vmatprep.subr.bf16.mxu0 0
        %270 = vmatpush1.bf16.msra.mxu0 0
        %271 = vmatprep.subr.bf16.mxu0 0
        %272 = vmatpush1.bf16.msra.mxu0 0
        %273 = vmatprep.subr.bf16.mxu0 0
        %274 = vmatpush1.bf16.msra.mxu0 0
        %275 = vmatprep.subr.bf16.mxu0 0
        %276 = vmatpush1.bf16.msra.mxu0 0
        %277 = vmatprep.subr.bf16.mxu0 0
        %278 = vmatpush1.bf16.msra.mxu0 0
        %279 = vmatprep.subr.bf16.mxu0 0
        %280 = vmatpush1.bf16.msra.mxu0 0
        %281 = vmatprep.mubr.bf16.mxu0 0
        %282 = vmatmul.mubr.bf16.gmra.mrb[0].mxu0 %v240
        %v283 = vpop.f32.mrb[0].mxu0
        %v284 = vadd.f32 %v211, %v283
        %v285 = vpop.f32.mrb[0].mxu0
        %v286 = vadd.f32 %v211, %v285
        %v287 = vpop.f32.mrb[0].mxu0
        %v288 = vpop.f32.mrb[0].mxu0
        %289 = vdwg.mxu0
        %v290 = vmul.f32 %v284, 0.1
        %v291 = vmul.f32 %v286, 0.1
        %v292 = vmax.f32 %v284, %v290
        %v293 = vmax.f32 %v286, %v291
        %294 = vst [vmem:[%s188] sm:$0xff] %v292
        %295 = vst [vmem:[%s188 + $0x8] sm:$0xff] %v293
        %s296 = sand.u32 %s109, 1
        %s297 = scalar_lea.sflag [#allocation3], %s296
        %s298 = sand.u32 %s109, 1
        %s299 = smul.addr %s298, 16
        %s300 = scalar_lea.vmem [#allocation2], %s299
        // Predicated region
        $region33: #{tpu_custom_call.1} parent=31 // pred_check
          %p301 = pneg %p119
        $region34: #{tpu_custom_call.1} parent=31 // pred_check_branch
          %303 = sbr.rel (%p301) target = $region36
        $region35: #{tpu_custom_call.1} parent=31 // pred_region
          %s304 = smul.u32 2, %s22
          %s306 = ssub.s32 256, 256
          %307 = vsyncadd %s297, %s306
          %s308 = smul.addr %s21, 2
          %s309 = sadd.s32 %s304, %s308
          %s310 = smul.addr %s309, 128
          %s311 = scalar_lea.hbm %s3, %s310
          %s313 = sshll.u32 %s300, 4
          %s314 = int_to_ptr.vmem [resolvable:$true] %s313
          %316 = dma.vmem_to_hbm [thread:$0]  %s314, 256, %s311, %s297
        $region36: #{tpu_custom_call.1} parent=31 // pred_fallthru
          _
      $region32: #{tpu_custom_call.1} parent=5 // pred_fallthru
        _
      %p317 = scmp.le.s32.totalorder 2, %s12
      // Predicated region
      $region37: #{tpu_custom_call.1} parent=5 // pred_check
        %p318 = pneg %p317
      $region38: #{tpu_custom_call.1} parent=5 // pred_check_branch
        %320 = sbr.rel (%p318) target = $region40
      $region39: #{tpu_custom_call.1} parent=5 // pred_region
        %s321 = ssub.s32 %s12, 2
        // Predicated region
        $region41: #{tpu_custom_call.1} parent=39 // pred_check
          %p322 = pneg %p125
        $region42: #{tpu_custom_call.1} parent=39 // pred_check_branch
          %324 = sbr.rel (%p322) target = $region44
        $region43: #{tpu_custom_call.1} parent=39 // pred_region
          %s325 = sand.u32 %s110, 1
          %s326 = scalar_lea.sflag [#allocation3], %s325
          %s327 = sand.u32 %s110, 1
          %s328 = smul.addr %s327, 16
          %s329 = scalar_lea.vmem [#allocation2], %s328
          %330 = dma.done %s326, 256
        $region44: #{tpu_custom_call.1} parent=39 // pred_fallthru
          _
      $region40: #{tpu_custom_call.1} parent=5 // pred_fallthru
        _
    $region6: #{tpu_custom_call.1} parent=1 // loop_footer
      %s16 = sadd.s32 1, %s12
    $region7: #{tpu_custom_call.1} parent=1 // loop_footer_branch
      %11 = sbr.rel target = $region3
    $region8: #{tpu_custom_call.1} parent=1 // loop_exit
      _
    %331 = vsyncpa [#allocation3], 1
    %s332 = scalar_lea.sflag [#allocation3], 1
    %333 = vsyncpa %s332, 1

</llo_original>
